<compile_context>
chip_gen: v5e
topology: v5e:2x2
jax: 0.10.0
libtpu: 0.0.40
codegen_flags: <defaults>
</compile_context>

<pallas_src>
import jax
import jax.numpy as jnp
from jax.experimental import pallas as pl
from jax.experimental.pallas import tpu as pltpu


# ----------------------------------------------------------------------------
# Helpers
# ----------------------------------------------------------------------------
def _round_up(x, m):
    return ((x + m - 1) // m) * m


def _tpu_generation():
    """Best-effort TPU generation detection; falls back to a conservative mode."""
    try:
        kind = jax.devices()[0].device_kind.lower()
    except Exception:
        return "unknown"
    if "v5e" in kind or "v5 lite" in kind or "v5lite" in kind:
        return "v5e"
    if "v6" in kind:
        return "v6e"
    if "v7" in kind or "tpu7" in kind or "7x" in kind:
        return "v7x"
    return "unknown"


# (tm_big, th_cap, vmem_limit_bytes or None, vmem_tile_budget_bytes, two_tensorcores)
_GEN_CONFIG = {
    "v5e":     (384,  512, 100 << 20, 96 << 20, False),
    "v6e":     (1024, 512, 100 << 20, 96 << 20, False),
    "v7x":     (512,  256, 44 << 20,  40 << 20, True),
    "unknown": (256,  256, None,      16 << 20, False),
}


def _vmem_footprint(tm, th, D, out_bytes, separate_acc):
    """Rough double-buffered VMEM footprint of one grid step (bytes)."""
    w13 = 2 * (D * 2 * th * 2)          # (D, 2*th) bf16, double-buffered
    w2 = 2 * (th * D * 2)               # (th, D)   bf16, double-buffered
    xb = 2 * (tm * D * 2)               # x tile bf16, double-buffered
    ob = 2 * (tm * D * out_bytes)       # output tile, double-buffered
    acc = tm * D * 4 if separate_acc else 0
    return w13 + w2 + xb + ob + acc


def _select_tiles(M, D, H_pad, gen, out_bytes, separate_acc):
    tm_big, th_cap, vmem_limit, budget, two_cores = _GEN_CONFIG[gen]

    # hidden tile: largest 128-multiple <= cap that divides the padded H
    th = 128
    for cand in (512, 256, 128):
        if cand <= th_cap and H_pad % cand == 0:
            th = cand
            break

    # token tile: single m-step for small M on 1-TC chips (weights stream once),
    # >= 2 m-steps on v7x so both TensorCores get work.
    tm = min(tm_big, _round_up(M, 16))
    if two_cores and M > 16:
        tm = min(tm, _round_up(pl.cdiv(M, 2), 16))
    tm = max(tm, 16)

    # shrink until the double-buffered tile footprint fits the per-TC budget
    while tm > 64 and _vmem_footprint(tm, th, D, out_bytes, separate_acc) > budget:
        tm = max(16, _round_up(tm // 2, 16))
    while th > 128 and _vmem_footprint(tm, th, D, out_bytes, separate_acc) > budget:
        th //= 2

    return tm, th, vmem_limit


# ----------------------------------------------------------------------------
# Kernels
# ----------------------------------------------------------------------------
def _ffn_kernel_accout(x_ref, w13_ref, w2_ref, o_ref):
    """f32 output: accumulate directly into the resident output tile (no scratch)."""
    h = pl.program_id(1)

    @pl.when(h == 0)
    def _init():
        o_ref[...] = jnp.zeros_like(o_ref)

    th = w2_ref.shape[1]
    # One fused MXU call for the gate+up projections: (tm, D) x (D, 2*th).
    g = jnp.dot(x_ref[...], w13_ref[0], preferred_element_type=jnp.float32)
    h1 = g[:, :th]
    h3 = g[:, th:]
    gated = (h1 * jax.nn.sigmoid(h1)) * h3            # SiLU * up, in f32
    o_ref[...] += jnp.dot(gated.astype(w2_ref.dtype), w2_ref[0],
                          preferred_element_type=jnp.float32)


def _ffn_kernel_scratch(x_ref, w13_ref, w2_ref, o_ref, acc_ref):
    """Generic output dtype: accumulate in an f32 VMEM scratch, cast at the end."""
    h = pl.program_id(1)

    @pl.when(h == 0)
    def _init():
        acc_ref[...] = jnp.zeros_like(acc_ref)

    th = w2_ref.shape[1]
    g = jnp.dot(x_ref[...], w13_ref[0], preferred_element_type=jnp.float32)
    h1 = g[:, :th]
    h3 = g[:, th:]
    gated = (h1 * jax.nn.sigmoid(h1)) * h3
    acc_ref[...] += jnp.dot(gated.astype(w2_ref.dtype), w2_ref[0],
                            preferred_element_type=jnp.float32)

    @pl.when(h == pl.num_programs(1) - 1)
    def _finalize():
        o_ref[...] = acc_ref[...].astype(o_ref.dtype)


# ----------------------------------------------------------------------------
# Wrapper
# ----------------------------------------------------------------------------
def feed_forward(x, w1_t, w3_t, w2_t, *, tm=None, th=None,
                 compute_dtype=jnp.bfloat16):
    """SwiGLU FFN forward.

    x    : (B, S, D)
    w1_t : (D, H)   gate projection (transposed vs torch.nn.Linear)
    w3_t : (D, H)   up projection   (transposed vs torch)
    w2_t : (H, D)   down projection (transposed vs torch)
    """
    B, S, D = x.shape
    H = w1_t.shape[1]
    M = B * S
    out_dtype = x.dtype
    out_bytes = jnp.dtype(out_dtype).itemsize
    acc_in_output = (jnp.dtype(out_dtype) == jnp.dtype(jnp.float32))

    gen = _tpu_generation()

    # --- pad hidden dim to a lane-aligned multiple (keeps dots unmasked) ---
    H_pad = _round_up(H, 256)
    if H_pad != H:
        pad = H_pad - H
        w1_t = jnp.pad(w1_t, ((0, 0), (0, pad)))
        w3_t = jnp.pad(w3_t, ((0, 0), (0, pad)))
        w2_t = jnp.pad(w2_t, ((0, pad), (0, 0)))

    auto_tm, auto_th, vmem_limit = _select_tiles(
        M, D, H_pad, gen, out_bytes, separate_acc=not acc_in_output)
    tm = auto_tm if tm is None else tm
    th = auto_th if th is None else th
    assert H_pad % th == 0, "th must divide the padded hidden_dim"
    nh = H_pad // th

    # --- token tiling / padding ---
    m_steps = pl.cdiv(M, tm)
    M_pad = m_steps * tm
    x2d = x.reshape(M, D).astype(compute_dtype)       # bf16 cast once, here
    if M_pad != M:
        x2d = jnp.pad(x2d, ((0, M_pad - M), (0, 0)))

    # --- weight prep: bf16, blocked along H, gate/up fused into one stream ---
    w1b = w1_t.astype(compute_dtype).reshape(D, nh, th).transpose(1, 0, 2)
    w3b = w3_t.astype(compute_dtype).reshape(D, nh, th).transpose(1, 0, 2)
    w13 = jnp.concatenate([w1b, w3b], axis=-1)                 # (nh, D, 2*th)
    w2b = w2_t.astype(compute_dtype).reshape(nh, th, D)        # (nh, th, D)

    weight_bytes = (w13.size * w13.dtype.itemsize
                    + w2b.size * w2b.dtype.itemsize)
    cost = pl.CostEstimate(
        flops=6 * M_pad * D * H_pad,                 # 3 matmuls of 2*M*D*H flops
        transcendentals=M_pad * H_pad,               # sigmoid
        bytes_accessed=(x2d.size * x2d.dtype.itemsize
                        + m_steps * weight_bytes     # weights re-streamed per m-step
                        + M_pad * D * out_bytes),
    )

    if acc_in_output:
        kernel = _ffn_kernel_accout
        scratch_shapes = []
    else:
        kernel = _ffn_kernel_scratch
        scratch_shapes = [pltpu.VMEM((tm, D), jnp.float32)]

    compiler_kwargs = dict(dimension_semantics=("parallel", "arbitrary"))
    if vmem_limit is not None:
        compiler_kwargs["vmem_limit_bytes"] = int(vmem_limit)

    out2d = pl.pallas_call(
        kernel,
        out_shape=jax.ShapeDtypeStruct((M_pad, D), out_dtype),
        grid_spec=pltpu.PrefetchScalarGridSpec(
            num_scalar_prefetch=0,
            grid=(m_steps, nh),                                     # (tokens, hidden)
            in_specs=[
                pl.BlockSpec((tm, D), lambda i, h: (i, 0)),         # x tile
                pl.BlockSpec((1, D, 2 * th), lambda i, h: (h, 0, 0)),  # [w1|w3] blk
                pl.BlockSpec((1, th, D), lambda i, h: (h, 0, 0)),   # w2 blk
            ],
            out_specs=pl.BlockSpec((tm, D), lambda i, h: (i, 0)),
            scratch_shapes=scratch_shapes,
        ),
        compiler_params=pltpu.CompilerParams(**compiler_kwargs),
        cost_estimate=cost,
    )(x2d, w13, w2b)

    return out2d[:M].reshape(B, S, D)


# ----------------------------------------------------------------------------
# Reference & self-test
# ----------------------------------------------------------------------------
def _reference(x, w1_t, w3_t, w2_t, compute_dtype=jnp.bfloat16):
    """Precision-matched reference (bf16 matmul operands, f32 accumulation)."""
    xc = x.astype(compute_dtype)
    h1 = jnp.matmul(xc, w1_t.astype(compute_dtype),
                    preferred_element_type=jnp.float32)
    h3 = jnp.matmul(xc, w3_t.astype(compute_dtype),
                    preferred_element_type=jnp.float32)
    gated = (h1 * jax.nn.sigmoid(h1)) * h3
    out = jnp.matmul(gated.astype(compute_dtype), w2_t.astype(compute_dtype),
                     preferred_element_type=jnp.float32)
    return out.astype(x.dtype)


if __name__ == "__main__":
    # Config (mirrors LLMConfig hidden_dim derivation):
    #   dim=64, multiple_of=32, dropout=0.0
    #   hidden = 4*64 = 256 -> int(2*256/3) = 170 -> round up to 32 -> 192
    dim = 64
    multiple_of = 32
    hidden = 4 * dim
    hidden = int(2 * hidden / 3)
    hidden_dim = multiple_of * ((hidden + multiple_of - 1) // multiple_of)

    batch, seq = 2, 8

    key = jax.random.PRNGKey(0)
    kx, k1, k2, k3 = jax.random.split(key, 4)

    x = jax.random.normal(kx, (batch, seq, dim), dtype=jnp.float32)
    # torch.nn.Linear weight is (out, in); we store the transpose (in, out).
    w1_t = (jax.random.normal(k1, (dim, hidden_dim), dtype=jnp.float32)
            * (1.0 / jnp.sqrt(dim)))
    w3_t = (jax.random.normal(k3, (dim, hidden_dim), dtype=jnp.float32)
            * (1.0 / jnp.sqrt(dim)))
    w2_t = (jax.random.normal(k2, (hidden_dim, dim), dtype=jnp.float32)
            * (1.0 / jnp.sqrt(hidden_dim)))

    out = feed_forward(x, w1_t, w3_t, w2_t)
    out = jax.block_until_ready(out)

    ref = _reference(x, w1_t, w3_t, w2_t)
    assert out.shape == (batch, seq, dim)
    assert jnp.allclose(out, ref, atol=1e-2, rtol=1e-2), (
        "mismatch vs reference; max abs diff = "
        f"{float(jnp.max(jnp.abs(out - ref)))}")

    print("KERNEL_OK")
</pallas_src>

<mosaic_0001>
module attributes {stable_mosaic.version = 11 : i64} {
  func.func @_ffn_kernel_accout(%arg0: i32, %arg1: i32, %arg2: memref<16x64xbf16, #tpu.memory_space<vmem>>, %arg3: memref<1x64x512xbf16, #tpu.memory_space<vmem>>, %arg4: memref<1x256x64xbf16, #tpu.memory_space<vmem>>, %arg5: memref<16x64xf32, #tpu.memory_space<vmem>>) attributes {dimension_semantics = [#tpu.dimension_semantics<parallel>, #tpu.dimension_semantics<arbitrary>], iteration_bounds = array<i64: 1, 1>, scalar_prefetch = 0 : i64, scratch_operands = 0 : i64, tpu.core_type = #tpu.core_type<tc>, window_params = [{transform_indices = @transform_0, window_bounds = array<i64: 16, 64>}, {transform_indices = @transform_1, window_bounds = array<i64: 1, 64, 512>}, {transform_indices = @transform_2, window_bounds = array<i64: 1, 256, 64>}, {transform_indices = @transform_3, window_bounds = array<i64: 16, 64>}]} {
    %c0_i32 = arith.constant 0 : i32
    %0 = arith.cmpi eq, %arg1, %c0_i32 : i32
    %1 = arith.extui %0 : i1 to i32
    %c0_i32_0 = arith.constant 0 : i32
    %2 = arith.cmpi ne, %1, %c0_i32_0 : i32
    scf.if %2 {
      %cst_14 = arith.constant 0.000000e+00 : f32
      %23 = vector.broadcast %cst_14 : f32 to vector<16x64xf32>
      %c0_15 = arith.constant 0 : index
      %c0_16 = arith.constant 0 : index
      %24 = vector.load %arg5[%c0_15, %c0_16] : memref<16x64xf32, #tpu.memory_space<vmem>>, vector<16x64xf32>
      tpu.vector_store %arg5[%c0_15, %c0_16], %23 {strides = array<i32>} : memref<16x64xf32, #tpu.memory_space<vmem>>, vector<16x64xf32>,
    } else {
    }
    %c0 = arith.constant 0 : index
    %c0_1 = arith.constant 0 : index
    %3 = vector.load %arg2[%c0, %c0_1] : memref<16x64xbf16, #tpu.memory_space<vmem>>, vector<16x64xbf16>
    %c0_2 = arith.constant 0 : index
    %c0_3 = arith.constant 0 : index
    %c0_4 = arith.constant 0 : index
    %4 = vector.load %arg3[%c0_2, %c0_3, %c0_4] : memref<1x64x512xbf16, #tpu.memory_space<vmem>>, vector<1x64x512xbf16>
    %5 = vector.shape_cast %4 : vector<1x64x512xbf16> to vector<64x512xbf16>
    %cst = arith.constant dense<0.000000e+00> : vector<16x512xf32>
    %6 = tpu.matmul %3, %5, %cst {dimension_numbers = #tpu.dot_dimension_numbers<[1], [0], [0], [1], [0, 0, 1, 1], [], []>} : vector<16x64xbf16>, vector<64x512xbf16>, vector<16x512xf32> -> vector<16x512xf32>
    %7 = vector.extract_strided_slice %6 {offsets = [0, 0], sizes = [16, 256], strides = [1, 1]} : vector<16x512xf32> to vector<16x256xf32>
    %8 = vector.extract_strided_slice %6 {offsets = [0, 256], sizes = [16, 256], strides = [1, 1]} : vector<16x512xf32> to vector<16x256xf32>
    %9 = arith.negf %7 : vector<16x256xf32>
    %10 = math.exp %9 : vector<16x256xf32>
    %cst_5 = arith.constant 1.000000e+00 : f32
    %11 = vector.broadcast %cst_5 : f32 to vector<16x256xf32>
    %12 = arith.addf %11, %10 : vector<16x256xf32>
    %13 = arith.divf %11, %12 : vector<16x256xf32>
    %14 = arith.mulf %7, %13 : vector<16x256xf32>
    %15 = arith.mulf %14, %8 : vector<16x256xf32>
    %c0_6 = arith.constant 0 : index
    %c0_7 = arith.constant 0 : index
    %16 = vector.load %arg5[%c0_6, %c0_7] : memref<16x64xf32, #tpu.memory_space<vmem>>, vector<16x64xf32>
    %17 = arith.truncf %15 : vector<16x256xf32> to vector<16x256xbf16>
    %c0_8 = arith.constant 0 : index
    %c0_9 = arith.constant 0 : index
    %c0_10 = arith.constant 0 : index
    %18 = vector.load %arg4[%c0_8, %c0_9, %c0_10] : memref<1x256x64xbf16, #tpu.memory_space<vmem>>, vector<1x256x64xbf16>
    %19 = vector.shape_cast %18 : vector<1x256x64xbf16> to vector<256x64xbf16>
    %cst_11 = arith.constant dense<0.000000e+00> : vector<16x64xf32>
    %20 = tpu.matmul %17, %19, %cst_11 {dimension_numbers = #tpu.dot_dimension_numbers<[1], [0], [0], [1], [0, 0, 1, 1], [], []>} : vector<16x256xbf16>, vector<256x64xbf16>, vector<16x64xf32> -> vector<16x64xf32>
    %21 = arith.addf %16, %20 : vector<16x64xf32>
    %c0_12 = arith.constant 0 : index
    %c0_13 = arith.constant 0 : index
    %22 = vector.load %arg5[%c0_12, %c0_13] : memref<16x64xf32, #tpu.memory_space<vmem>>, vector<16x64xf32>
    tpu.vector_store %arg5[%c0_12, %c0_13], %21 {strides = array<i32>} : memref<16x64xf32, #tpu.memory_space<vmem>>, vector<16x64xf32>,
    return
  }
  func.func @transform_0(%arg0: i32, %arg1: i32) -> (i32, i32) {
    %c0_i32 = arith.constant 0 : i32
    %c0_i32_0 = arith.constant 0 : i32
    return %arg0, %c0_i32 : i32, i32
  }
  func.func @transform_1(%arg0: i32, %arg1: i32) -> (i32, i32, i32) {
    %c0_i32 = arith.constant 0 : i32
    %c0_i32_0 = arith.constant 0 : i32
    %c0_i32_1 = arith.constant 0 : i32
    return %arg1, %c0_i32, %c0_i32_0 : i32, i32, i32
  }
  func.func @transform_2(%arg0: i32, %arg1: i32) -> (i32, i32, i32) {
    %c0_i32 = arith.constant 0 : i32
    %c0_i32_0 = arith.constant 0 : i32
    %c0_i32_1 = arith.constant 0 : i32
    return %arg1, %c0_i32, %c0_i32_0 : i32, i32, i32
  }
  func.func @transform_3(%arg0: i32, %arg1: i32) -> (i32, i32) {
    %c0_i32 = arith.constant 0 : i32
    %c0_i32_0 = arith.constant 0 : i32
    return %arg0, %c0_i32 : i32, i32
  }
}

</mosaic_0001>

<llo_original>
// kernel: tpu_custom_call.1
$region0: #{tpu_custom_call.1}
  #allocation0 [shape = 'u32[]', space=smem, size = 0x4, offset = 0x4, fixed_abs, tag = 'smem constant byte address 0x4 - core index']
  #allocation1 [shape = 'u32[72,128]{1,0:T(1,128)}', space=vmem, size = 0x9000, scoped, tag = 'internal scratch']
  %s0 = inlined_call_operand.vmem [shape: bf16[16,64], index: 0, kind: input, shape index: {}]
  %s1 = inlined_call_operand.vmem [shape: bf16[1,64,512], index: 1, kind: input, shape index: {}]
  %s2 = inlined_call_operand.vmem [shape: bf16[1,256,64], index: 2, kind: input, shape index: {}]
  %s3 = inlined_call_operand.hbm [shape: f32[16,64], index: 3, kind: output, shape index: {}]
  %s4 = sld [smem:[#allocation0]]
  $region26: #{tpu_custom_call.1} parent=0
    _
  %s6 = ssub.s32 1, %s4
  %s7 = scalar_select 0, %s6, %s4
  $region1: #{tpu_custom_call.1} parent=0
    #allocation2 [shape = 'u8[8192]{0}', space=vmem, size = 0x2000, scoped, tag = 'output window, operand 0, single buffered']
    #allocation3 [shape = 's32[1]{0}', space=sflag, size = 0x4, scoped, tag = 'scoped memory for tpu_custom_call.1']
    %8 = vsyncpa [#allocation3], 0
    // Predicated region
    $region2: #{tpu_custom_call.1} parent=1 // pred_check
      _
    $region3: #{tpu_custom_call.1} parent=1 // pred_check_branch
      %10 = sbr.rel (0) target = $region5
    $region4: #{tpu_custom_call.1} parent=1 // pred_region
      _
    $region5: #{tpu_custom_call.1} parent=1 // pred_fallthru
      _
    // Predicated region
    $region6: #{tpu_custom_call.1} parent=1 // pred_check
      _
    $region7: #{tpu_custom_call.1} parent=1 // pred_check_branch
      %12 = sbr.rel (0) target = $region9
    $region8: #{tpu_custom_call.1} parent=1 // pred_region
      _
    $region9: #{tpu_custom_call.1} parent=1 // pred_fallthru
      _
    // Predicated region
    $region10: #{tpu_custom_call.1} parent=1 // pred_check
      _
    $region11: #{tpu_custom_call.1} parent=1 // pred_check_branch
      %14 = sbr.rel (0) target = $region13
    $region12: #{tpu_custom_call.1} parent=1 // pred_region
      _
    $region13: #{tpu_custom_call.1} parent=1 // pred_fallthru
      _
    %p16 = scmp.eq.s32.totalorder 0, 0
    // Predicated region
    $region14: #{tpu_custom_call.1} parent=1 // pred_check
      %p17 = pneg %p16
    $region15: #{tpu_custom_call.1} parent=1 // pred_check_branch
      %19 = sbr.rel (%p17) target = $region17
    $region16: #{tpu_custom_call.1} parent=1 // pred_region
      %vm20 = vcmask 523264
      %21 = vst.msk [vmem:[#allocation2] sm:$0xff] %vm20, 0.0
      %22 = vst.msk [vmem:[#allocation2 + $0x8] sm:$0xff] %vm20, 0.0
    $region17: #{tpu_custom_call.1} parent=1 // pred_fallthru
      _
    %v23 = vld [vmem:[%s0] sm:$0xf]
    %v24 = vld [vmem:[%s0 + $0x4] sm:$0xf]
    %v25 = vld [vmem:[%s1] sm:$0xff]
    %v26 = vld [vmem:[%s1 + $0x8] sm:$0xff]
    %v27 = vld [vmem:[%s1 + $0x10] sm:$0xff]
    %v28 = vld [vmem:[%s1 + $0x18] sm:$0xff]
    %v29 = vld [vmem:[%s1 + $0x20] sm:$0xff]
    %v30 = vld [vmem:[%s1 + $0x28] sm:$0xff]
    %v31 = vld [vmem:[%s1 + $0x30] sm:$0xff]
    %v32 = vld [vmem:[%s1 + $0x38] sm:$0xff]
    %v33 = vld [vmem:[%s1 + $0x40] sm:$0xff]
    %v34 = vld [vmem:[%s1 + $0x48] sm:$0xff]
    %v35 = vld [vmem:[%s1 + $0x50] sm:$0xff]
    %v36 = vld [vmem:[%s1 + $0x58] sm:$0xff]
    %v37 = vld [vmem:[%s1 + $0x60] sm:$0xff]
    %v38 = vld [vmem:[%s1 + $0x68] sm:$0xff]
    %v39 = vld [vmem:[%s1 + $0x70] sm:$0xff]
    %v40 = vld [vmem:[%s1 + $0x78] sm:$0xff]
    %v43 = vunpack.c.l.b16 %v23
    %v44 = vunpack.c.l.b16 %v24
    %v45 = vpack.c.b16 %v44, %v43
    %v62 = vunpack.c.l.b16 %v25
    %v63 = vunpack.c.h.b16 %v25
    %v64 = vunpack.c.l.b16 %v26
    %v65 = vunpack.c.h.b16 %v26
    %v66 = vunpack.c.l.b16 %v27
    %v67 = vunpack.c.h.b16 %v27
    %v68 = vunpack.c.l.b16 %v28
    %v69 = vunpack.c.h.b16 %v28
    %v70 = vunpack.c.l.b16 %v29
    %v71 = vunpack.c.h.b16 %v29
    %v72 = vunpack.c.l.b16 %v30
    %v73 = vunpack.c.h.b16 %v30
    %v74 = vunpack.c.l.b16 %v31
    %v75 = vunpack.c.h.b16 %v31
    %v76 = vunpack.c.l.b16 %v32
    %v77 = vunpack.c.h.b16 %v32
    %v78 = vunpack.c.l.b16 %v33
    %v79 = vunpack.c.h.b16 %v33
    %v80 = vunpack.c.l.b16 %v34
    %v81 = vunpack.c.h.b16 %v34
    %v82 = vunpack.c.l.b16 %v35
    %v83 = vunpack.c.h.b16 %v35
    %v84 = vunpack.c.l.b16 %v36
    %v85 = vunpack.c.h.b16 %v36
    %v86 = vunpack.c.l.b16 %v37
    %v87 = vunpack.c.h.b16 %v37
    %v88 = vunpack.c.l.b16 %v38
    %v89 = vunpack.c.h.b16 %v38
    %v90 = vunpack.c.l.b16 %v39
    %v91 = vunpack.c.h.b16 %v39
    %v92 = vunpack.c.l.b16 %v40
    %v93 = vunpack.c.h.b16 %v40
    %v94 = vpack.c.b16 %v66, %v62
    %v95 = vpack.c.b16 %v67, %v63
    %v96 = vpack.c.b16 %v68, %v64
    %v97 = vpack.c.b16 %v69, %v65
    %v98 = vpack.c.b16 %v74, %v70
    %v99 = vpack.c.b16 %v75, %v71
    %v100 = vpack.c.b16 %v76, %v72
    %v101 = vpack.c.b16 %v77, %v73
    %v102 = vpack.c.b16 %v82, %v78
    %v103 = vpack.c.b16 %v83, %v79
    %v104 = vpack.c.b16 %v84, %v80
    %v105 = vpack.c.b16 %v85, %v81
    %v106 = vpack.c.b16 %v90, %v86
    %v107 = vpack.c.b16 %v91, %v87
    %v108 = vpack.c.b16 %v92, %v88
    %v109 = vpack.c.b16 %v93, %v89
    %vm126 = vcmask 523264
    %v128 = vsel %vm126, %v45, 0
    %130 = vmatpush.bf16.msra.mxu0 0
    %131 = vmatpush.bf16.msra.mxu0 0
    %132 = vmatpush.bf16.msra.mxu0 0
    %133 = vmatpush.bf16.msra.mxu0 0
    %134 = vmatpush.bf16.msra.mxu0 %v106
    %135 = vmatpush.bf16.msra.mxu0 %v102
    %136 = vmatpush.bf16.msra.mxu0 %v98
    %137 = vmatpush.bf16.msra.mxu0 %v94
    %138 = vmatmul.bf16.gmra.mxu0 %v128
    %v139 = vpop.f32.mrf.mxu0
    %v140 = vadd.f32 0.0, %v139
    %v141 = vpop.f32.mrf.mxu0
    %v142 = vadd.f32 0.0, %v141
    %143 = vdwg.mxu0
    %144 = vmatpush.bf16.msra.mxu0 0
    %145 = vmatpush.bf16.msra.mxu0 0
    %146 = vmatpush.bf16.msra.mxu0 0
    %147 = vmatpush.bf16.msra.mxu0 0
    %148 = vmatpush.bf16.msra.mxu0 %v107
    %149 = vmatpush.bf16.msra.mxu0 %v103
    %150 = vmatpush.bf16.msra.mxu0 %v99
    %151 = vmatpush.bf16.msra.mxu0 %v95
    %152 = vmatmul.bf16.gmra.mxu0 %v128
    %v153 = vpop.f32.mrf.mxu0
    %v154 = vadd.f32 0.0, %v153
    %v155 = vpop.f32.mrf.mxu0
    %v156 = vadd.f32 0.0, %v155
    %157 = vdwg.mxu0
    %158 = vmatpush.bf16.msra.mxu0 0
    %159 = vmatpush.bf16.msra.mxu0 0
    %160 = vmatpush.bf16.msra.mxu0 0
    %161 = vmatpush.bf16.msra.mxu0 0
    %162 = vmatpush.bf16.msra.mxu0 %v108
    %163 = vmatpush.bf16.msra.mxu0 %v104
    %164 = vmatpush.bf16.msra.mxu0 %v100
    %165 = vmatpush.bf16.msra.mxu0 %v96
    %166 = vmatmul.bf16.gmra.mxu0 %v128
    %v167 = vpop.f32.mrf.mxu0
    %v168 = vadd.f32 0.0, %v167
    %v169 = vpop.f32.mrf.mxu0
    %v170 = vadd.f32 0.0, %v169
    %171 = vdwg.mxu0
    %172 = vmatpush.bf16.msra.mxu0 0
    %173 = vmatpush.bf16.msra.mxu0 0
    %174 = vmatpush.bf16.msra.mxu0 0
    %175 = vmatpush.bf16.msra.mxu0 0
    %176 = vmatpush.bf16.msra.mxu0 %v109
    %177 = vmatpush.bf16.msra.mxu0 %v105
    %178 = vmatpush.bf16.msra.mxu0 %v101
    %179 = vmatpush.bf16.msra.mxu0 %v97
    %180 = vmatmul.bf16.gmra.mxu0 %v128
    %v181 = vpop.f32.mrf.mxu0
    %v182 = vadd.f32 0.0, %v181
    %v183 = vpop.f32.mrf.mxu0
    %v184 = vadd.f32 0.0, %v183
    %185 = vdwg.mxu0
    %v186 = vxor.u32 %v140, 2147483648
    %v187 = vxor.u32 %v154, 2147483648
    %v188 = vxor.u32 %v142, 2147483648
    %v189 = vxor.u32 %v156, 2147483648
    %v190 = vmul.f32 %v186, 1.442695
    %v191 = vpow.pop %v190
    %v192 = vmul.f32 %v187, 1.442695
    %v193 = vpow.pop %v192
    %v194 = vmul.f32 %v188, 1.442695
    %v195 = vpow.pop %v194
    %v196 = vmul.f32 %v189, 1.442695
    %v197 = vpow.pop %v196
    %v198 = vadd.f32 %v191, 1.0
    %v199 = vadd.f32 %v193, 1.0
    %v200 = vadd.f32 %v195, 1.0
    %v201 = vadd.f32 %v197, 1.0
    %v202 = vrcp.pop %v198
    %v203 = vmul.f32 %v198, %v202
    %v204 = vsub.f32 1.0, %v203
    %v205 = vmul.f32 %v202, %v204
    %v206 = vadd.f32 %v202, %v205
    %vm207 = vweird.f32 %v198
    %vm208 = vweird.f32 %v202
    %vm209 = vmor %vm207, %vm208
    %v210 = vsel %vm209, %v202, %v206
    %v211 = vand.u32 2147483647, %v198
    %vm212 = vcmp.eq.f32.partialorder %v211, 8.507059e+37
    %v213 = vand.u32 %v198, 2147483648
    %v214 = vor.u32 1.1754944e-38, %v213
    %v215 = vsel %vm212, %v214, %v210
    %v216 = vmul.f32 1.0, %v215
    %v217 = vrcp.pop %v199
    %v218 = vmul.f32 %v199, %v217
    %v219 = vsub.f32 1.0, %v218
    %v220 = vmul.f32 %v217, %v219
    %v221 = vadd.f32 %v217, %v220
    %vm222 = vweird.f32 %v199
    %vm223 = vweird.f32 %v217
    %vm224 = vmor %vm222, %vm223
    %v225 = vsel %vm224, %v217, %v221
    %v226 = vand.u32 2147483647, %v199
    %vm227 = vcmp.eq.f32.partialorder %v226, 8.507059e+37
    %v228 = vand.u32 %v199, 2147483648
    %v229 = vor.u32 1.1754944e-38, %v228
    %v230 = vsel %vm227, %v229, %v225
    %v231 = vmul.f32 1.0, %v230
    %v232 = vrcp.pop %v200
    %v233 = vmul.f32 %v200, %v232
    %v234 = vsub.f32 1.0, %v233
    %v235 = vmul.f32 %v232, %v234
    %v236 = vadd.f32 %v232, %v235
    %vm237 = vweird.f32 %v200
    %vm238 = vweird.f32 %v232
    %vm239 = vmor %vm237, %vm238
    %v240 = vsel %vm239, %v232, %v236
    %v241 = vand.u32 2147483647, %v200
    %vm242 = vcmp.eq.f32.partialorder %v241, 8.507059e+37
    %v243 = vand.u32 %v200, 2147483648
    %v244 = vor.u32 1.1754944e-38, %v243
    %v245 = vsel %vm242, %v244, %v240
    %v246 = vmul.f32 1.0, %v245
    %v247 = vrcp.pop %v201
    %v248 = vmul.f32 %v201, %v247
    %v249 = vsub.f32 1.0, %v248
    %v250 = vmul.f32 %v247, %v249
    %v251 = vadd.f32 %v247, %v250
    %vm252 = vweird.f32 %v201
    %vm253 = vweird.f32 %v247
    %vm254 = vmor %vm252, %vm253
    %v255 = vsel %vm254, %v247, %v251
    %v256 = vand.u32 2147483647, %v201
    %vm257 = vcmp.eq.f32.partialorder %v256, 8.507059e+37
    %v258 = vand.u32 %v201, 2147483648
    %v259 = vor.u32 1.1754944e-38, %v258
    %v260 = vsel %vm257, %v259, %v255
    %v261 = vmul.f32 1.0, %v260
    %v262 = vmul.f32 %v140, %v216
    %v263 = vmul.f32 %v154, %v231
    %v264 = vmul.f32 %v142, %v246
    %v265 = vmul.f32 %v156, %v261
    %v266 = vmul.f32 %v262, %v168
    %v267 = vmul.f32 %v263, %v182
    %v268 = vmul.f32 %v264, %v170
    %v269 = vmul.f32 %v265, %v184
    %v270 = vld [vmem:[#allocation2] sm:$0xff]
    %v271 = vld [vmem:[#allocation2 + $0x8] sm:$0xff]
    %v272 = vpack.c.bf16 %v268, %v266
    %v273 = vpack.c.bf16 %v269, %v267
    %v274 = vld [vmem:[%s2] sm:$0xf]
    %v275 = vld [vmem:[%s2 + $0x4] sm:$0xf]
    %v276 = vld [vmem:[%s2 + $0x8] sm:$0xf]
    %v277 = vld [vmem:[%s2 + $0xc] sm:$0xf]
    %v278 = vld [vmem:[%s2 + $0x10] sm:$0xf]
    %v279 = vld [vmem:[%s2 + $0x14] sm:$0xf]
    %v280 = vld [vmem:[%s2 + $0x18] sm:$0xf]
    %v281 = vld [vmem:[%s2 + $0x1c] sm:$0xf]
    %v282 = vld [vmem:[%s2 + $0x20] sm:$0xf]
    %v283 = vld [vmem:[%s2 + $0x24] sm:$0xf]
    %v284 = vld [vmem:[%s2 + $0x28] sm:$0xf]
    %v285 = vld [vmem:[%s2 + $0x2c] sm:$0xf]
    %v286 = vld [vmem:[%s2 + $0x30] sm:$0xf]
    %v287 = vld [vmem:[%s2 + $0x34] sm:$0xf]
    %v288 = vld [vmem:[%s2 + $0x38] sm:$0xf]
    %v289 = vld [vmem:[%s2 + $0x3c] sm:$0xf]
    %v290 = vld [vmem:[%s2 + $0x40] sm:$0xf]
    %v291 = vld [vmem:[%s2 + $0x44] sm:$0xf]
    %v292 = vld [vmem:[%s2 + $0x48] sm:$0xf]
    %v293 = vld [vmem:[%s2 + $0x4c] sm:$0xf]
    %v294 = vld [vmem:[%s2 + $0x50] sm:$0xf]
    %v295 = vld [vmem:[%s2 + $0x54] sm:$0xf]
    %v296 = vld [vmem:[%s2 + $0x58] sm:$0xf]
    %v297 = vld [vmem:[%s2 + $0x5c] sm:$0xf]
    %v298 = vld [vmem:[%s2 + $0x60] sm:$0xf]
    %v299 = vld [vmem:[%s2 + $0x64] sm:$0xf]
    %v300 = vld [vmem:[%s2 + $0x68] sm:$0xf]
    %v301 = vld [vmem:[%s2 + $0x6c] sm:$0xf]
    %v302 = vld [vmem:[%s2 + $0x70] sm:$0xf]
    %v303 = vld [vmem:[%s2 + $0x74] sm:$0xf]
    %v304 = vld [vmem:[%s2 + $0x78] sm:$0xf]
    %v305 = vld [vmem:[%s2 + $0x7c] sm:$0xf]
    %v338 = vunpack.c.l.b16 %v274
    %v339 = vunpack.c.l.b16 %v275
    %v340 = vunpack.c.l.b16 %v276
    %v341 = vunpack.c.l.b16 %v277
    %v342 = vunpack.c.l.b16 %v278
    %v343 = vunpack.c.l.b16 %v279
    %v344 = vunpack.c.l.b16 %v280
    %v345 = vunpack.c.l.b16 %v281
    %v346 = vunpack.c.l.b16 %v282
    %v347 = vunpack.c.l.b16 %v283
    %v348 = vunpack.c.l.b16 %v284
    %v349 = vunpack.c.l.b16 %v285
    %v350 = vunpack.c.l.b16 %v286
    %v351 = vunpack.c.l.b16 %v287
    %v352 = vunpack.c.l.b16 %v288
    %v353 = vunpack.c.l.b16 %v289
    %v354 = vunpack.c.l.b16 %v290
    %v355 = vunpack.c.l.b16 %v291
    %v356 = vunpack.c.l.b16 %v292
    %v357 = vunpack.c.l.b16 %v293
    %v358 = vunpack.c.l.b16 %v294
    %v359 = vunpack.c.l.b16 %v295
    %v360 = vunpack.c.l.b16 %v296
    %v361 = vunpack.c.l.b16 %v297
    %v362 = vunpack.c.l.b16 %v298
    %v363 = vunpack.c.l.b16 %v299
    %v364 = vunpack.c.l.b16 %v300
    %v365 = vunpack.c.l.b16 %v301
    %v366 = vunpack.c.l.b16 %v302
    %v367 = vunpack.c.l.b16 %v303
    %v368 = vunpack.c.l.b16 %v304
    %v369 = vunpack.c.l.b16 %v305
    %v370 = vpack.c.b16 %v339, %v338
    %v371 = vpack.c.b16 %v341, %v340
    %v372 = vpack.c.b16 %v343, %v342
    %v373 = vpack.c.b16 %v345, %v344
    %v374 = vpack.c.b16 %v347, %v346
    %v375 = vpack.c.b16 %v349, %v348
    %v376 = vpack.c.b16 %v351, %v350
    %v377 = vpack.c.b16 %v353, %v352
    %v378 = vpack.c.b16 %v355, %v354
    %v379 = vpack.c.b16 %v357, %v356
    %v380 = vpack.c.b16 %v359, %v358
    %v381 = vpack.c.b16 %v361, %v360
    %v382 = vpack.c.b16 %v363, %v362
    %v383 = vpack.c.b16 %v365, %v364
    %v384 = vpack.c.b16 %v367, %v366
    %v385 = vpack.c.b16 %v369, %v368
    %402 = vmatpush.bf16.msra.mxu0 %v377
    %403 = vmatpush.bf16.msra.mxu0 %v376
    %404 = vmatpush.bf16.msra.mxu0 %v375
    %405 = vmatpush.bf16.msra.mxu0 %v374
    %406 = vmatpush.bf16.msra.mxu0 %v373
    %407 = vmatpush.bf16.msra.mxu0 %v372
    %408 = vmatpush.bf16.msra.mxu0 %v371
    %409 = vmatpush.bf16.msra.mxu0 %v370
    %410 = vmatmul.bf16.gmra.mxu0 %v272
    %v411 = vpop.f32.mrf.mxu0
    %v412 = vadd.f32 0.0, %v411
    %v413 = vpop.f32.mrf.mxu0
    %v414 = vadd.f32 0.0, %v413
    %415 = vdwg.mxu0
    %416 = vmatpush.bf16.msra.mxu0 %v385
    %417 = vmatpush.bf16.msra.mxu0 %v384
    %418 = vmatpush.bf16.msra.mxu0 %v383
    %419 = vmatpush.bf16.msra.mxu0 %v382
    %420 = vmatpush.bf16.msra.mxu0 %v381
    %421 = vmatpush.bf16.msra.mxu0 %v380
    %422 = vmatpush.bf16.msra.mxu0 %v379
    %423 = vmatpush.bf16.msra.mxu0 %v378
    %424 = vmatmul.bf16.gmra.mxu0 %v273
    %v425 = vpop.f32.mrf.mxu0
    %v426 = vadd.f32 %v412, %v425
    %v427 = vpop.f32.mrf.mxu0
    %v428 = vadd.f32 %v414, %v427
    %429 = vdwg.mxu0
    %v430 = vadd.f32 %v270, %v426
    %v431 = vadd.f32 %v271, %v428
    %432 = vst.msk [vmem:[#allocation2] sm:$0xff] %vm126, %v430
    %433 = vst.msk [vmem:[#allocation2 + $0x8] sm:$0xff] %vm126, %v431
    // Predicated region
    $region18: #{tpu_custom_call.1} parent=1 // pred_check
      _
    $region19: #{tpu_custom_call.1} parent=1 // pred_check_branch
      %435 = sbr.rel (0) target = $region21
    $region20: #{tpu_custom_call.1} parent=1 // pred_region
      %437 = vsyncadd [#allocation3], 0
      %s438 = sshll.u32 [#allocation2], 4
      %s439 = int_to_ptr.vmem [resolvable:$true] %s438
      %s440 = sshll.u32 %s3, 4
      %s441 = int_to_ptr.hbm [resolvable:$true] %s440
      %446 = dma.vmem_to_hbm [thread:$0]  %s439, 256, %s441, [#allocation3], 128, 128, 8
    $region21: #{tpu_custom_call.1} parent=1 // pred_fallthru
      _
    // Predicated region
    $region22: #{tpu_custom_call.1} parent=1 // pred_check
      _
    $region23: #{tpu_custom_call.1} parent=1 // pred_check_branch
      %448 = sbr.rel (0) target = $region25
    $region24: #{tpu_custom_call.1} parent=1 // pred_region
      %450 = dma.done [#allocation3], 256
    $region25: #{tpu_custom_call.1} parent=1 // pred_fallthru
      _
    %451 = vsyncpa [#allocation3], 1

</llo_original>
